<compile_context>
chip_gen: v7x
topology: tpu7x:2x2x1
jax: 0.10.0
libtpu: 0.0.40
codegen_flags: <defaults>
</compile_context>

<pallas_src>
import jax
import jax.numpy as jnp
from jax.experimental import pallas as pl
from jax.experimental.pallas import tpu as pltpu


def _round_up(x, m):
    return ((x + m - 1) // m) * m


def patch_embed_kernel(patches_ref, w_ref, posb_ref, out_ref):
    # patches_ref: (TB, TN, Kp) bf16 — TB images' flattened patch tiles
    # w_ref:       (Kp, Ep)     bf16 — conv weight as a matmul (grid-resident)
    # posb_ref:    (TN, Ep)     f32  — pos_embed + bias (outer-axis resident)
    # out_ref:     (TB, TN, Ep) f32
    w = w_ref[...]
    posb = posb_ref[...]
    for i in range(patches_ref.shape[0]):   # TB is small & static -> unrolled
        proj = jnp.dot(patches_ref[i], w, preferred_element_type=jnp.float32)
        out_ref[i] = (proj + posb).astype(out_ref.dtype)


def patch_embedding(x, weight, bias, pos_embed, patch_size):
    """Forward pass equivalent to PatchEmbedding.forward.

    x:         (B, C, H, W)  float32  (NCHW, as in PyTorch)
    weight:    (E, C, p, p)  float32  (PyTorch Conv2d weight layout)
    bias:      (E,)          float32
    pos_embed: (1, N, E)     float32
    Returns (out, grid_size) with out: (B, N, E) float32.
    """
    B, C, H, W = x.shape
    p = patch_size
    E = weight.shape[0]
    Gh, Gw = H // p, W // p
    N = Gh * Gw
    K = C * p * p

    # ---- padded sizes -----------------------------------------------------
    # Pad a dim to a multiple of 128 only when large and misaligned; small
    # dims keep full-extent blocks (legal, and padding tiny E/K would multiply
    # HBM traffic by 128/E, far worse than masked partial stores).
    Ep = E if (E % 128 == 0 or E < 128) else _round_up(E, 128)
    Kp = K if (K % 128 == 0 or K < 128) else _round_up(K, 128)

    # ---- generation-aware VMEM budget ------------------------------------
    try:
        info = pltpu.get_tpu_info()
        vmem_cap = int(getattr(info, "vmem_capacity_bytes", 64 << 20))
    except Exception:  # interpret mode / non-TPU backend
        vmem_cap = 64 << 20
    vmem_budget = (vmem_cap * 3) // 4      # ~48 MiB on v7x, ~96 MiB on v5e/v6e

    def residency(tb, tn):
        # Double-buffered streamed blocks + resident weight block.
        return (2 * tb * tn * Kp * 2       # patches tiles  (bf16)
                + 2 * tn * Ep * 4          # pos+bias tile  (f32)
                + 2 * tb * tn * Ep * 4     # output tiles   (f32)
                + 2 * Kp * Ep * 2)         # weight block   (bf16, resident)

    # ---- tile sizes -------------------------------------------------------
    # TN: full N for small N (posb then fully grid-resident, no N-padding
    # slice when N is 16-aligned); otherwise 256 rows (bf16/MXU native).
    TN = _round_up(N, 16) if N <= 512 else 256
    while TN > 16 and residency(1, TN) + (2 << 20) > vmem_budget:
        TN = max(16, ((TN // 2) + 15) // 16 * 16)
    Npad = _round_up(N, TN)
    n_tiles = Npad // TN

    # TB: several images per grid step (largest divisor of B <= 8 that fits).
    TB = min(B, 8)
    while B % TB != 0:
        TB -= 1
    while TB > 1 and residency(TB, TN) + (2 << 20) > vmem_budget:
        TB -= 1
        while B % TB != 0:
            TB -= 1
    b_tiles = B // TB

    vmem_limit = int(min(max(residency(TB, TN) + (2 << 20), 32 << 20),
                         vmem_budget))

    # ---- wrapper glue (XLA-fused: bf16 cast -> patchify -> pad) -----------
    # Cast to bf16 BEFORE the transpose so the im2col materialization moves
    # half-width data.  Inner order (C, p, p) matches Conv2d's reduction.
    xb = x.astype(jnp.bfloat16)
    xp = xb.reshape(B, C, Gh, p, Gw, p)
    xp = jnp.transpose(xp, (0, 2, 4, 1, 3, 5))            # (B, Gh, Gw, C, p, p)
    patches = xp.reshape(B, N, K)
    if Npad != N or Kp != K:
        patches = jnp.pad(patches, ((0, 0), (0, Npad - N), (0, Kp - K)))

    w_mat = weight.astype(jnp.bfloat16).reshape(E, K).T    # (K, E) bf16
    if Kp != K or Ep != E:
        w_mat = jnp.pad(w_mat, ((0, Kp - K), (0, Ep - E)))

    # Fold conv bias into pos_embed (single f32 epilogue add in the kernel).
    posb = pos_embed.reshape(N, E) + bias.reshape(1, E)    # (N, E) f32
    if Npad != N or Ep != E:
        posb = jnp.pad(posb, ((0, Npad - N), (0, Ep - E)))

    # ---- pallas_call ------------------------------------------------------
    # Grid: patch-row tiles OUTER, batch tiles INNER, both "parallel" (v7x
    # megacore sharding).  posb's index_map depends only on the outer axis, so
    # it is re-DMA'd only when the patch-row tile changes; the weight's
    # index_map is constant, so it is DMA'd once.
    grid = (n_tiles, b_tiles)

    out_padded = pl.pallas_call(
        patch_embed_kernel,
        out_shape=jax.ShapeDtypeStruct((B, Npad, Ep), jnp.float32),
        grid_spec=pltpu.PrefetchScalarGridSpec(
            num_scalar_prefetch=0,
            grid=grid,
            in_specs=[
                pl.BlockSpec((TB, TN, Kp), lambda n, b: (b, n, 0)),
                pl.BlockSpec((Kp, Ep), lambda n, b: (0, 0)),
                pl.BlockSpec((TN, Ep), lambda n, b: (n, 0)),
            ],
            out_specs=pl.BlockSpec((TB, TN, Ep), lambda n, b: (b, n, 0)),
        ),
        compiler_params=pltpu.CompilerParams(
            dimension_semantics=("parallel", "parallel"),
            vmem_limit_bytes=vmem_limit),
    )(patches, w_mat, posb)

    # Slice padding off only when padding actually happened (avoids an extra
    # full-output XLA copy in the common aligned case).
    out = out_padded if (Npad == N and Ep == E) else out_padded[:, :N, :E]
    return out, (Gh, Gw)


if __name__ == "__main__":
    # Small shapes consistent with the module:
    # batch=2, in_channels=4, img 16x16, patch 4 -> 16 patches, embed_dim=32
    B, C, H, W = 2, 4, 16, 16
    patch_size = 4
    embed_dim = 32
    Gh, Gw = H // patch_size, W // patch_size
    num_patches = Gh * Gw

    key = jax.random.PRNGKey(0)
    kx, kw, kb, kp = jax.random.split(key, 4)

    x = jax.random.normal(kx, (B, C, H, W), dtype=jnp.float32)
    # nn.Conv2d params (deterministic synthetic init)
    weight = jax.random.normal(
        kw, (embed_dim, C, patch_size, patch_size), dtype=jnp.float32) * 0.02
    bias = jax.random.normal(kb, (embed_dim,), dtype=jnp.float32) * 0.02
    # nn.Parameter(torch.randn(1, num_patches, embed_dim))
    pos_embed = jax.random.normal(
        kp, (1, num_patches, embed_dim), dtype=jnp.float32)

    out, grid_size = patch_embedding(x, weight, bias, pos_embed, patch_size)
    out = jax.block_until_ready(out)

    # Sanity check against a pure-JAX f32 reference (same semantics as PyTorch).
    ref_conv = jax.lax.conv_general_dilated(
        x, weight, window_strides=(patch_size, patch_size), padding="VALID",
        dimension_numbers=("NCHW", "OIHW", "NCHW"))
    ref_conv = ref_conv + bias.reshape(1, embed_dim, 1, 1)
    ref = jnp.transpose(ref_conv.reshape(B, embed_dim, num_patches), (0, 2, 1))
    ref = ref + pos_embed

    assert out.shape == (B, num_patches, embed_dim)
    assert grid_size == (Gh, Gw)
    # bf16 MXU inputs with f32 accumulation -> slightly looser tolerance.
    assert jnp.allclose(out, ref, atol=1e-2, rtol=1e-2)

    print("KERNEL_OK")
</pallas_src>

<mosaic_0001>
module attributes {stable_mosaic.version = 11 : i64} {
  func.func @patch_embed_kernel(%arg0: i32, %arg1: i32, %arg2: memref<2x16x64xbf16, #tpu.memory_space<vmem>>, %arg3: memref<64x32xbf16, #tpu.memory_space<vmem>>, %arg4: memref<16x32xf32, #tpu.memory_space<vmem>>, %arg5: memref<2x16x32xf32, #tpu.memory_space<vmem>>) attributes {dimension_semantics = [#tpu.dimension_semantics<parallel>, #tpu.dimension_semantics<parallel>], iteration_bounds = array<i64: 1, 1>, scalar_prefetch = 0 : i64, scratch_operands = 0 : i64, tpu.core_type = #tpu.core_type<tc>, window_params = [{transform_indices = @transform_0, window_bounds = array<i64: 2, 16, 64>}, {pipeline_mode = #tpu.pipeline_mode<synchronous>, transform_indices = @transform_1, window_bounds = array<i64: 64, 32>}, {transform_indices = @transform_2, window_bounds = array<i64: 16, 32>}, {transform_indices = @transform_3, window_bounds = array<i64: 2, 16, 32>}]} {
    %c0 = arith.constant 0 : index
    %c0_0 = arith.constant 0 : index
    %0 = vector.load %arg3[%c0, %c0_0] : memref<64x32xbf16, #tpu.memory_space<vmem>>, vector<64x32xbf16>
    %c0_1 = arith.constant 0 : index
    %c0_2 = arith.constant 0 : index
    %1 = vector.load %arg4[%c0_1, %c0_2] : memref<16x32xf32, #tpu.memory_space<vmem>>, vector<16x32xf32>
    %c0_3 = arith.constant 0 : index
    %c0_4 = arith.constant 0 : index
    %c0_5 = arith.constant 0 : index
    %2 = vector.load %arg2[%c0_3, %c0_4, %c0_5] : memref<2x16x64xbf16, #tpu.memory_space<vmem>>, vector<1x16x64xbf16>
    %3 = vector.shape_cast %2 : vector<1x16x64xbf16> to vector<16x64xbf16>
    %cst = arith.constant dense<0.000000e+00> : vector<16x32xf32>
    %4 = tpu.matmul %3, %0, %cst {dimension_numbers = #tpu.dot_dimension_numbers<[1], [0], [0], [1], [0, 0, 1, 1], [], []>} : vector<16x64xbf16>, vector<64x32xbf16>, vector<16x32xf32> -> vector<16x32xf32>
    %5 = arith.addf %4, %1 : vector<16x32xf32>
    %c0_6 = arith.constant 0 : index
    %c0_7 = arith.constant 0 : index
    %c0_8 = arith.constant 0 : index
    %6 = vector.load %arg5[%c0_6, %c0_7, %c0_8] : memref<2x16x32xf32, #tpu.memory_space<vmem>>, vector<1x16x32xf32>
    %7 = vector.shape_cast %6 : vector<1x16x32xf32> to vector<16x32xf32>
    %8 = vector.shape_cast %5 : vector<16x32xf32> to vector<1x16x32xf32>
    tpu.vector_store %arg5[%c0_6, %c0_7, %c0_8], %8 {strides = array<i32>} : memref<2x16x32xf32, #tpu.memory_space<vmem>>, vector<1x16x32xf32>,
    %c1 = arith.constant 1 : index
    %c0_9 = arith.constant 0 : index
    %c0_10 = arith.constant 0 : index
    %9 = vector.load %arg2[%c1, %c0_9, %c0_10] : memref<2x16x64xbf16, #tpu.memory_space<vmem>>, vector<1x16x64xbf16>
    %10 = vector.shape_cast %9 : vector<1x16x64xbf16> to vector<16x64xbf16>
    %cst_11 = arith.constant dense<0.000000e+00> : vector<16x32xf32>
    %11 = tpu.matmul %10, %0, %cst_11 {dimension_numbers = #tpu.dot_dimension_numbers<[1], [0], [0], [1], [0, 0, 1, 1], [], []>} : vector<16x64xbf16>, vector<64x32xbf16>, vector<16x32xf32> -> vector<16x32xf32>
    %12 = arith.addf %11, %1 : vector<16x32xf32>
    %c1_12 = arith.constant 1 : index
    %c0_13 = arith.constant 0 : index
    %c0_14 = arith.constant 0 : index
    %13 = vector.load %arg5[%c1_12, %c0_13, %c0_14] : memref<2x16x32xf32, #tpu.memory_space<vmem>>, vector<1x16x32xf32>
    %14 = vector.shape_cast %13 : vector<1x16x32xf32> to vector<16x32xf32>
    %15 = vector.shape_cast %12 : vector<16x32xf32> to vector<1x16x32xf32>
    tpu.vector_store %arg5[%c1_12, %c0_13, %c0_14], %15 {strides = array<i32>} : memref<2x16x32xf32, #tpu.memory_space<vmem>>, vector<1x16x32xf32>,
    return
  }
  func.func @transform_0(%arg0: i32, %arg1: i32) -> (i32, i32, i32) {
    %c0_i32 = arith.constant 0 : i32
    %c0_i32_0 = arith.constant 0 : i32
    return %arg1, %arg0, %c0_i32 : i32, i32, i32
  }
  func.func @transform_1(%arg0: i32, %arg1: i32) -> (i32, i32) {
    %c0_i32 = arith.constant 0 : i32
    %c0_i32_0 = arith.constant 0 : i32
    %c0_i32_1 = arith.constant 0 : i32
    return %c0_i32, %c0_i32_0 : i32, i32
  }
  func.func @transform_2(%arg0: i32, %arg1: i32) -> (i32, i32) {
    %c0_i32 = arith.constant 0 : i32
    %c0_i32_0 = arith.constant 0 : i32
    return %arg0, %c0_i32 : i32, i32
  }
  func.func @transform_3(%arg0: i32, %arg1: i32) -> (i32, i32, i32) {
    %c0_i32 = arith.constant 0 : i32
    %c0_i32_0 = arith.constant 0 : i32
    return %arg1, %arg0, %c0_i32 : i32, i32, i32
  }
}

</mosaic_0001>

<llo_original>
// kernel: tpu_custom_call.1
$region0: #{tpu_custom_call.1}
  #allocation0 [shape = 'u32[]', space=smem, size = 0x4, offset = 0x4, fixed_abs, tag = 'smem constant byte address 0x4 - core index']
  #allocation1 [shape = 'u32[144,128]{1,0:T(1,128)}', space=vmem, size = 0x12000, scoped, tag = 'internal scratch']
  %s0 = inlined_call_operand.vmem [shape: bf16[2,16,64], index: 0, kind: input, shape index: {}]
  %s1 = inlined_call_operand.vmem [shape: bf16[64,32], index: 1, kind: input, shape index: {}]
  %s2 = inlined_call_operand.vmem [shape: f32[16,32], index: 2, kind: input, shape index: {}]
  %s3 = inlined_call_operand.hbm [shape: f32[2,16,32], index: 3, kind: output, shape index: {}]
  %s4 = sld [smem:[#allocation0]]
  $region22: #{tpu_custom_call.1} parent=0
    _
  %s6 = ssub.s32 1, %s4
  %s7 = scalar_select 0, %s6, %s4
  $region1: #{tpu_custom_call.1} parent=0
    #allocation2 [shape = 'u8[16384]{0}', space=vmem, size = 0x4000, scoped, tag = 'output window, operand 0, single buffered']
    #allocation3 [shape = 's32[1]{0}', space=sflag, size = 0x4, scoped, tag = 'scoped memory for tpu_custom_call.1']
    %8 = vsyncpa [#allocation3], 0
    // Predicated region
    $region2: #{tpu_custom_call.1} parent=1 // pred_check
      _
    $region3: #{tpu_custom_call.1} parent=1 // pred_check_branch
      %10 = sbr.rel (0) target = $region5
    $region4: #{tpu_custom_call.1} parent=1 // pred_region
      _
    $region5: #{tpu_custom_call.1} parent=1 // pred_fallthru
      _
    // Predicated region
    $region6: #{tpu_custom_call.1} parent=1 // pred_check
      _
    $region7: #{tpu_custom_call.1} parent=1 // pred_check_branch
      %12 = sbr.rel (0) target = $region9
    $region8: #{tpu_custom_call.1} parent=1 // pred_region
      _
    $region9: #{tpu_custom_call.1} parent=1 // pred_fallthru
      _
    // Predicated region
    $region10: #{tpu_custom_call.1} parent=1 // pred_check
      _
    $region11: #{tpu_custom_call.1} parent=1 // pred_check_branch
      %14 = sbr.rel (0) target = $region13
    $region12: #{tpu_custom_call.1} parent=1 // pred_region
      _
    $region13: #{tpu_custom_call.1} parent=1 // pred_fallthru
      _
    %v16 = vld [vmem:[%s1] sm:$0xf]
    %v17 = vld [vmem:[%s1 + $0x4] sm:$0xf]
    %v18 = vld [vmem:[%s1 + $0x8] sm:$0xf]
    %v19 = vld [vmem:[%s1 + $0xc] sm:$0xf]
    %v20 = vld [vmem:[%s1 + $0x10] sm:$0xf]
    %v21 = vld [vmem:[%s1 + $0x14] sm:$0xf]
    %v22 = vld [vmem:[%s1 + $0x18] sm:$0xf]
    %v23 = vld [vmem:[%s1 + $0x1c] sm:$0xf]
    %v24 = vld [vmem:[%s2] sm:$0xff]
    %v25 = vld [vmem:[%s2 + $0x8] sm:$0xff]
    %v26 = vld [vmem:[%s0] sm:$0xf]
    %v27 = vld [vmem:[%s0 + $0x4] sm:$0xf]
    %v30 = vunpack.c.l.b16 %v26
    %v31 = vunpack.c.l.b16 %v27
    %v32 = vpack.c.b16 %v31, %v30
    %v41 = vunpack.c.l.b16 %v16
    %v42 = vunpack.c.l.b16 %v17
    %v43 = vunpack.c.l.b16 %v18
    %v44 = vunpack.c.l.b16 %v19
    %v45 = vunpack.c.l.b16 %v20
    %v46 = vunpack.c.l.b16 %v21
    %v47 = vunpack.c.l.b16 %v22
    %v48 = vunpack.c.l.b16 %v23
    %v49 = vpack.c.b16 %v42, %v41
    %v50 = vpack.c.b16 %v44, %v43
    %v51 = vpack.c.b16 %v46, %v45
    %v52 = vpack.c.b16 %v48, %v47
    %vm57 = vcmask 523264
    %v59 = vsel %vm57, %v32, 0
    %61 = vmatprep.subr.bf16.mxu0 0
    %62 = vmatpush1.bf16.msra.mxu0 %v49
    %63 = vmatprep.subr.bf16.mxu0 0
    %64 = vmatpush1.bf16.msra.mxu0 %v50
    %65 = vmatprep.subr.bf16.mxu0 0
    %66 = vmatpush1.bf16.msra.mxu0 %v51
    %67 = vmatprep.subr.bf16.mxu0 0
    %68 = vmatpush1.bf16.msra.mxu0 %v52
    %69 = vmatprep.subr.bf16.mxu0 0
    %70 = vmatpush1.bf16.msra.mxu0 0
    %71 = vmatprep.subr.bf16.mxu0 0
    %72 = vmatpush1.bf16.msra.mxu0 0
    %73 = vmatprep.subr.bf16.mxu0 0
    %74 = vmatpush1.bf16.msra.mxu0 0
    %75 = vmatprep.subr.bf16.mxu0 0
    %76 = vmatpush1.bf16.msra.mxu0 0
    %77 = vmatprep.subr.bf16.mxu0 0
    %78 = vmatpush1.bf16.msra.mxu0 0
    %79 = vmatprep.subr.bf16.mxu0 0
    %80 = vmatpush1.bf16.msra.mxu0 0
    %81 = vmatprep.subr.bf16.mxu0 0
    %82 = vmatpush1.bf16.msra.mxu0 0
    %83 = vmatprep.subr.bf16.mxu0 0
    %84 = vmatpush1.bf16.msra.mxu0 0
    %85 = vmatprep.subr.bf16.mxu0 0
    %86 = vmatpush1.bf16.msra.mxu0 0
    %87 = vmatprep.subr.bf16.mxu0 0
    %88 = vmatpush1.bf16.msra.mxu0 0
    %89 = vmatprep.subr.bf16.mxu0 0
    %90 = vmatpush1.bf16.msra.mxu0 0
    %91 = vmatprep.subr.bf16.mxu0 0
    %92 = vmatpush1.bf16.msra.mxu0 0
    %93 = vmatprep.mubr.bf16.mxu0 0
    %94 = vmatmul.mubr.bf16.gmra.mrb[0].mxu0 %v59
    %v95 = vpop.f32.mrb[0].mxu0
    %v96 = vadd.f32 %v24, %v95
    %v97 = vpop.f32.mrb[0].mxu0
    %v98 = vpop.f32.mrb[0].mxu0
    %v99 = vadd.f32 %v25, %v98
    %v100 = vpop.f32.mrb[0].mxu0
    %101 = vdwg.mxu0
    %vm102 = vcmask 261120
    %103 = vst.msk [vmem:[#allocation2] sm:$0xff] %vm102, %v96
    %104 = vst.msk [vmem:[#allocation2 + $0x8] sm:$0xff] %vm102, %v99
    %s105 = scalar_lea.vmem %s0, 8
    %v106 = vld [vmem:[%s105] sm:$0xf]
    %v107 = vld [vmem:[%s105 + $0x4] sm:$0xf]
    %v110 = vunpack.c.l.b16 %v106
    %v111 = vunpack.c.l.b16 %v107
    %v112 = vpack.c.b16 %v111, %v110
    %v114 = vsel %vm57, %v112, 0
    %116 = vmatprep.subr.bf16.mxu0 0
    %117 = vmatpush1.bf16.msra.mxu0 %v49
    %118 = vmatprep.subr.bf16.mxu0 0
    %119 = vmatpush1.bf16.msra.mxu0 %v50
    %120 = vmatprep.subr.bf16.mxu0 0
    %121 = vmatpush1.bf16.msra.mxu0 %v51
    %122 = vmatprep.subr.bf16.mxu0 0
    %123 = vmatpush1.bf16.msra.mxu0 %v52
    %124 = vmatprep.subr.bf16.mxu0 0
    %125 = vmatpush1.bf16.msra.mxu0 0
    %126 = vmatprep.subr.bf16.mxu0 0
    %127 = vmatpush1.bf16.msra.mxu0 0
    %128 = vmatprep.subr.bf16.mxu0 0
    %129 = vmatpush1.bf16.msra.mxu0 0
    %130 = vmatprep.subr.bf16.mxu0 0
    %131 = vmatpush1.bf16.msra.mxu0 0
    %132 = vmatprep.subr.bf16.mxu0 0
    %133 = vmatpush1.bf16.msra.mxu0 0
    %134 = vmatprep.subr.bf16.mxu0 0
    %135 = vmatpush1.bf16.msra.mxu0 0
    %136 = vmatprep.subr.bf16.mxu0 0
    %137 = vmatpush1.bf16.msra.mxu0 0
    %138 = vmatprep.subr.bf16.mxu0 0
    %139 = vmatpush1.bf16.msra.mxu0 0
    %140 = vmatprep.subr.bf16.mxu0 0
    %141 = vmatpush1.bf16.msra.mxu0 0
    %142 = vmatprep.subr.bf16.mxu0 0
    %143 = vmatpush1.bf16.msra.mxu0 0
    %144 = vmatprep.subr.bf16.mxu0 0
    %145 = vmatpush1.bf16.msra.mxu0 0
    %146 = vmatprep.subr.bf16.mxu0 0
    %147 = vmatpush1.bf16.msra.mxu0 0
    %148 = vmatprep.mubr.bf16.mxu0 0
    %149 = vmatmul.mubr.bf16.gmra.mrb[0].mxu0 %v114
    %v150 = vpop.f32.mrb[0].mxu0
    %v151 = vadd.f32 %v24, %v150
    %v152 = vpop.f32.mrb[0].mxu0
    %v153 = vpop.f32.mrb[0].mxu0
    %v154 = vadd.f32 %v25, %v153
    %v155 = vpop.f32.mrb[0].mxu0
    %156 = vdwg.mxu0
    %s157 = scalar_lea.vmem [#allocation2], 16
    %158 = vst.msk [vmem:[%s157] sm:$0xff] %vm102, %v151
    %159 = vst.msk [vmem:[%s157 + $0x8] sm:$0xff] %vm102, %v154
    // Predicated region
    $region14: #{tpu_custom_call.1} parent=1 // pred_check
      _
    $region15: #{tpu_custom_call.1} parent=1 // pred_check_branch
      %161 = sbr.rel (0) target = $region17
    $region16: #{tpu_custom_call.1} parent=1 // pred_region
      %s163 = ssub.s32 512, 512
      %164 = vsyncadd [#allocation3], %s163
      %s165 = sshll.u32 [#allocation2], 4
      %s166 = int_to_ptr.vmem [resolvable:$true] %s165
      %171 = dma.vmem_to_hbm [thread:$0]  %s166, 512, %s3, [#allocation3], 128, 128, 8
    $region17: #{tpu_custom_call.1} parent=1 // pred_fallthru
      _
    // Predicated region
    $region18: #{tpu_custom_call.1} parent=1 // pred_check
      _
    $region19: #{tpu_custom_call.1} parent=1 // pred_check_branch
      %173 = sbr.rel (0) target = $region21
    $region20: #{tpu_custom_call.1} parent=1 // pred_region
      %174 = dma.done [#allocation3], 512
    $region21: #{tpu_custom_call.1} parent=1 // pred_fallthru
      _
    %175 = vsyncpa [#allocation3], 1

</llo_original>
